<compile_context>
chip_gen: v5e
topology: v5e:2x2
jax: 0.10.0
libtpu: 0.0.40
codegen_flags: <defaults>
</compile_context>

<pallas_src>
import jax
import jax.numpy as jnp
from jax.experimental import pallas as pl
from jax.experimental.pallas import tpu as pltpu

# ----------------------------- model dims -----------------------------------
B = 2                 # batch
C_IN = 4              # input channels
H = W = 16            # spatial
NUM_FEATURES = 32     # backbone output features (self.num_features)
HIDDEN = 32           # train_args['hidden_features']
NUM_METOS = 8         # train_args['num_metos']
BN_EPS = 1e-5

F = NUM_FEATURES
KC = 9 * C_IN                     # 36 im2col rows in (kh, kw, c) order
C8 = 8                            # channels padded to one sublane group
HPAD, WPAD = H + 2, W + 2         # spatially zero-padded (conv padding=1)
SEG = 384                         # per-image lane segment (>= 18*18, mult of 128)
BPAD = 8                          # batch rows padded to a sublane group
NPIX = B * SEG                    # 768 conv-output lanes (lane-dense)
MAXSHIFT = 2 * WPAD + 2           # 38 = largest 3x3 tap shift
XL = 896                          # x-pack lane width (>= NPIX + MAXSHIFT, mult of 128)
KCONV = 9 * C8                    # 72 = im2col contraction (taps x padded channels)

# packed-parameter row offsets (all multiples of 8 -> aligned slices)
OFF_CONVW = 0                     # (F, KCONV)   conv weight, transposed/lane-dense
OFF_CONVB = OFF_CONVW + F         # (F, 1)       conv bias as a column (lane 0)
OFF_W1 = OFF_CONVB + F            # (F, HIDDEN)  BN1-folded
OFF_W2 = OFF_W1 + F               # (HIDDEN, HIDDEN) BN2-folded
OFF_W3 = OFF_W2 + HIDDEN          # (HIDDEN, 128) cols >= NUM_METOS are zero
OFF_B = OFF_W3 + HIDDEN           # rows: [b1 ; b2 ; b3 ; zeros] as (1,128) rows
P_ROWS = OFF_B + 8                # 168


# ------------------------- fused forward kernel ------------------------------
def fused_kernel(x_ref, p_ref, o_ref):
    # x_ref: (C8 + BPAD, XL) f32
    #        rows 0:8   -> channels; lane n = b*SEG + hp*WPAD + wp of the
    #                      zero-padded image (zeros elsewhere / beyond data)
    #        rows 8:16  -> GAP selection rows: msel[b, n] = 1/(H*W) iff lane n
    #                      is a valid output pixel of image b (else 0)
    # p_ref: (P_ROWS, 128) f32 packed parameters (BN folded)
    # o_ref: (BPAD, 128) f32 -- rows 0:B, lanes 0:NUM_METOS are the result

    # --- fused im2col: 9 statically-shifted views -> (KCONV, NPIX) operand ---
    taps = []
    for kh in range(3):
        for kw in range(3):
            s = kh * WPAD + kw
            taps.append(x_ref[0:C8, s:s + NPIX])           # (8, 768)
    patches = jnp.concatenate(taps, axis=0)                # (72, 768)

    # --- conv 3x3 (pad=1) as ONE lane-dense GEMM + bias + ReLU ---------------
    conv_w = p_ref[OFF_CONVW:OFF_CONVW + F, 0:KCONV]       # (32, 72)
    conv_b = p_ref[OFF_CONVB:OFF_CONVB + F, 0:1]           # (32, 1) lane-broadcast
    act = jnp.dot(conv_w, patches, preferred_element_type=jnp.float32)  # (32, 768)
    act = jnp.maximum(act + conv_b, 0.0)

    # --- global average pool for all images at once (one GEMM) --------------
    msel = x_ref[C8:C8 + BPAD, 0:NPIX]                     # (8, 768)
    gap = jnp.dot(msel, jnp.transpose(act),
                  preferred_element_type=jnp.float32)      # (8, 32); rows >= B are 0

    # --- regression head, batched (M = BPAD); dropout = identity in eval ----
    w1 = p_ref[OFF_W1:OFF_W1 + F, 0:HIDDEN]                # (32, 32) BN1 folded
    w2 = p_ref[OFF_W2:OFF_W2 + HIDDEN, 0:HIDDEN]           # (32, 32) BN2 folded
    w3 = p_ref[OFF_W3:OFF_W3 + HIDDEN, :]                  # (32, 128) cols>=8 zero
    b1 = p_ref[OFF_B + 0:OFF_B + 1, 0:HIDDEN]              # (1, 32)
    b2 = p_ref[OFF_B + 1:OFF_B + 2, 0:HIDDEN]              # (1, 32)
    b3 = p_ref[OFF_B + 2:OFF_B + 3, :]                     # (1, 128) cols>=8 zero

    h = jnp.maximum(jnp.dot(gap, w1, preferred_element_type=jnp.float32) + b1, 0.0)
    h = jnp.maximum(jnp.dot(h, w2, preferred_element_type=jnp.float32) + b2, 0.0)
    # single unmasked (8, 128) store; wrapper slices [:B, :NUM_METOS]
    o_ref[...] = jnp.dot(h, w3, preferred_element_type=jnp.float32) + b3


# ------------------------------ glue / forward --------------------------------
@jax.jit
def metos_regressor_forward(x_nchw, p_pack):
    """x_nchw: (B, C_IN, H, W) -> (B, NUM_METOS)."""
    # Tiny layout transform of the input: channels -> sublanes (padded to 8),
    # zero-padded pixels of each image -> a 384-lane segment.
    xt = jnp.transpose(x_nchw, (0, 2, 3, 1))                            # (B,H,W,C)
    xp = jnp.pad(xt, ((0, 0), (1, 1), (1, 1), (0, C8 - C_IN)))          # (B,18,18,8)
    xl = jnp.transpose(xp, (3, 0, 1, 2)).reshape(C8, B, HPAD * WPAD)    # (8,B,324)
    xl = jnp.pad(xl, ((0, 0), (0, 0), (0, SEG - HPAD * WPAD)))          # (8,B,384)
    xl = xl.reshape(C8, NPIX)
    xl = jnp.pad(xl, ((0, 0), (0, XL - NPIX)))                          # (8, 896)

    # Constant GAP selection rows (per-image averaging mask); folded by XLA.
    n = jnp.arange(NPIX, dtype=jnp.int32)
    r = jnp.arange(BPAD, dtype=jnp.int32)[:, None]
    sp = n % SEG
    valid = (sp // WPAD < H) & (sp % WPAD < W)
    msel = jnp.where((n // SEG == r) & valid, 1.0 / (H * W), 0.0)
    msel = jnp.pad(msel.astype(jnp.float32), ((0, 0), (0, XL - NPIX)))  # (8, 896)

    x_pack = jnp.concatenate([xl, msel], axis=0)                        # (16, 896)

    out_pad = pl.pallas_call(
        fused_kernel,
        out_shape=jax.ShapeDtypeStruct((BPAD, 128), jnp.float32),
        grid=(1,),
        in_specs=[
            pl.BlockSpec((C8 + BPAD, XL), lambda i: (0, 0)),   # input + GAP mask
            pl.BlockSpec((P_ROWS, 128), lambda i: (0, 0)),     # packed params
        ],
        out_specs=pl.BlockSpec((BPAD, 128), lambda i: (0, 0)),
        compiler_params=pltpu.CompilerParams(dimension_semantics=("arbitrary",)),
    )(x_pack, p_pack)
    return out_pad[:B, :NUM_METOS]                                      # (B, 8)


def init_params(key):
    """PyTorch-like parameters (conv stand-in + head Linear/BN stats)."""
    ks = jax.random.split(key, 8)
    p = {}
    # stand-in feature extractor: Conv2d(C_IN, NUM_FEATURES, 3, padding=1)
    # flatten order of conv_w rows is (kh, kw, c).
    p["conv_w"] = jax.random.normal(ks[0], (KC, NUM_FEATURES), jnp.float32) * 0.1
    p["conv_b"] = jnp.zeros((1, NUM_FEATURES), jnp.float32)
    # regression head
    p["w1"] = jax.random.normal(ks[1], (NUM_FEATURES, HIDDEN), jnp.float32) * (1.0 / NUM_FEATURES ** 0.5)
    p["b1"] = jnp.full((1, HIDDEN), 0.01, jnp.float32)
    p["g1"] = 1.0 + 0.05 * jnp.arange(HIDDEN, dtype=jnp.float32).reshape(1, HIDDEN) / HIDDEN
    p["be1"] = jnp.full((1, HIDDEN), -0.02, jnp.float32)
    p["m1"] = 0.1 * jax.random.normal(ks[2], (1, HIDDEN), jnp.float32)
    p["v1"] = 1.0 + 0.1 * jax.random.uniform(ks[3], (1, HIDDEN), jnp.float32)
    p["w2"] = jax.random.normal(ks[4], (HIDDEN, HIDDEN), jnp.float32) * (1.0 / HIDDEN ** 0.5)
    p["b2"] = jnp.full((1, HIDDEN), -0.01, jnp.float32)
    p["g2"] = 1.0 + 0.03 * jnp.arange(HIDDEN, dtype=jnp.float32).reshape(1, HIDDEN) / HIDDEN
    p["be2"] = jnp.full((1, HIDDEN), 0.02, jnp.float32)
    p["m2"] = 0.1 * jax.random.normal(ks[5], (1, HIDDEN), jnp.float32)
    p["v2"] = 1.0 + 0.1 * jax.random.uniform(ks[6], (1, HIDDEN), jnp.float32)
    p["w3"] = jax.random.normal(ks[7], (HIDDEN, NUM_METOS), jnp.float32) * (1.0 / HIDDEN ** 0.5)
    p["b3"] = jnp.zeros((1, NUM_METOS), jnp.float32)
    return p


def fold_and_pack(p):
    """Fold BatchNorm1d (eval) into the Linears; pack everything into (168,128)."""
    s1 = p["g1"] * jax.lax.rsqrt(p["v1"] + BN_EPS)          # (1, HIDDEN)
    w1 = p["w1"] * s1
    b1 = (p["b1"] - p["m1"]) * s1 + p["be1"]
    s2 = p["g2"] * jax.lax.rsqrt(p["v2"] + BN_EPS)
    w2 = p["w2"] * s2
    b2 = (p["b2"] - p["m2"]) * s2 + p["be2"]

    # conv weights (KC, F), row order (kh, kw, c) -> lane-dense (F, 9*C8)
    cw = p["conv_w"].reshape(9, C_IN, F)
    cw = jnp.pad(cw, ((0, 0), (0, C8 - C_IN), (0, 0)))           # (9, 8, F)
    conv_wT = jnp.transpose(cw, (2, 0, 1)).reshape(F, KCONV)     # (32, 72)

    def pad128(m):
        m = jnp.asarray(m, jnp.float32)
        return jnp.pad(m, ((0, 0), (0, 128 - m.shape[1])))

    blk_convw = pad128(conv_wT)                                  # (32, 128)
    blk_convb = pad128(p["conv_b"].reshape(F, 1))                # (32, 128) lane 0
    blk_w1 = pad128(w1)                                          # (32, 128)
    blk_w2 = pad128(w2)                                          # (32, 128)
    # NOTE: w3/b3 columns >= NUM_METOS MUST stay zero (wrapper slices them off).
    blk_w3 = pad128(p["w3"])                                     # (32, 128)
    bias = jnp.concatenate([pad128(b1), pad128(b2), pad128(p["b3"])], axis=0)
    bias = jnp.pad(bias, ((0, 8 - bias.shape[0]), (0, 0)))       # (8, 128)

    pack = jnp.concatenate([blk_convw, blk_convb, blk_w1, blk_w2, blk_w3, bias],
                           axis=0).astype(jnp.float32)
    assert pack.shape == (P_ROWS, 128)
    return pack


if __name__ == "__main__":
    key = jax.random.PRNGKey(0)
    k_x, k_p = jax.random.split(key)
    x = jax.random.normal(k_x, (B, C_IN, H, W), jnp.float32)   # NCHW, like PyTorch
    params = init_params(k_p)
    p_pack = fold_and_pack(params)                             # once, outside forward

    out = metos_regressor_forward(x, p_pack)
    jax.block_until_ready(out)
    assert out.shape == (B, NUM_METOS) and out.dtype == jnp.float32
    print("KERNEL_OK")
</pallas_src>

<mosaic_0001>
module attributes {stable_mosaic.version = 11 : i64} {
  func.func @fused_kernel(%arg0: i32, %arg1: memref<16x896xf32, #tpu.memory_space<vmem>>, %arg2: memref<168x128xf32, #tpu.memory_space<vmem>>, %arg3: memref<8x128xf32, #tpu.memory_space<vmem>>) attributes {dimension_semantics = [#tpu.dimension_semantics<arbitrary>], iteration_bounds = array<i64: 1>, scalar_prefetch = 0 : i64, scratch_operands = 0 : i64, tpu.core_type = #tpu.core_type<tc>, window_params = [{pipeline_mode = #tpu.pipeline_mode<synchronous>, transform_indices = @transform_0, window_bounds = array<i64: 16, 896>}, {pipeline_mode = #tpu.pipeline_mode<synchronous>, transform_indices = @transform_1, window_bounds = array<i64: 168, 128>}, {pipeline_mode = #tpu.pipeline_mode<synchronous>, transform_indices = @transform_2, window_bounds = array<i64: 8, 128>}]} {
    %c0 = arith.constant 0 : index
    %c0_0 = arith.constant 0 : index
    %0 = vector.load %arg1[%c0, %c0_0] : memref<16x896xf32, #tpu.memory_space<vmem>>, vector<8x768xf32>
    %c0_1 = arith.constant 0 : index
    %c1 = arith.constant 1 : index
    %1 = vector.load %arg1[%c0_1, %c1] : memref<16x896xf32, #tpu.memory_space<vmem>>, vector<8x768xf32>
    %c0_2 = arith.constant 0 : index
    %c2 = arith.constant 2 : index
    %2 = vector.load %arg1[%c0_2, %c2] : memref<16x896xf32, #tpu.memory_space<vmem>>, vector<8x768xf32>
    %c0_3 = arith.constant 0 : index
    %c18 = arith.constant 18 : index
    %3 = vector.load %arg1[%c0_3, %c18] : memref<16x896xf32, #tpu.memory_space<vmem>>, vector<8x768xf32>
    %c0_4 = arith.constant 0 : index
    %c19 = arith.constant 19 : index
    %4 = vector.load %arg1[%c0_4, %c19] : memref<16x896xf32, #tpu.memory_space<vmem>>, vector<8x768xf32>
    %c0_5 = arith.constant 0 : index
    %c20 = arith.constant 20 : index
    %5 = vector.load %arg1[%c0_5, %c20] : memref<16x896xf32, #tpu.memory_space<vmem>>, vector<8x768xf32>
    %c0_6 = arith.constant 0 : index
    %c36 = arith.constant 36 : index
    %6 = vector.load %arg1[%c0_6, %c36] : memref<16x896xf32, #tpu.memory_space<vmem>>, vector<8x768xf32>
    %c0_7 = arith.constant 0 : index
    %c37 = arith.constant 37 : index
    %7 = vector.load %arg1[%c0_7, %c37] : memref<16x896xf32, #tpu.memory_space<vmem>>, vector<8x768xf32>
    %c0_8 = arith.constant 0 : index
    %c38 = arith.constant 38 : index
    %8 = vector.load %arg1[%c0_8, %c38] : memref<16x896xf32, #tpu.memory_space<vmem>>, vector<8x768xf32>
    %9 = tpu.concatenate %0, %1, %2, %3, %4, %5, %6, %7, %8 in 0 : vector<8x768xf32>, vector<8x768xf32>, vector<8x768xf32>, vector<8x768xf32>, vector<8x768xf32>, vector<8x768xf32>, vector<8x768xf32>, vector<8x768xf32>, vector<8x768xf32> -> vector<72x768xf32>
    %c0_9 = arith.constant 0 : index
    %c0_10 = arith.constant 0 : index
    %10 = vector.load %arg2[%c0_9, %c0_10] : memref<168x128xf32, #tpu.memory_space<vmem>>, vector<32x72xf32>
    %c32 = arith.constant 32 : index
    %c0_11 = arith.constant 0 : index
    %11 = vector.load %arg2[%c32, %c0_11] : memref<168x128xf32, #tpu.memory_space<vmem>>, vector<32x1xf32>
    %cst = arith.constant dense<0.000000e+00> : vector<32x768xf32>
    %12 = tpu.matmul %10, %9, %cst {dimension_numbers = #tpu.dot_dimension_numbers<[1], [0], [0], [1], [0, 0, 1, 1], [], []>} : vector<32x72xf32>, vector<72x768xf32>, vector<32x768xf32> -> vector<32x768xf32>
    %13 = vector.broadcast %11 : vector<32x1xf32> to vector<32x768xf32>
    %14 = arith.addf %12, %13 : vector<32x768xf32>
    %cst_12 = arith.constant 0.000000e+00 : f32
    %15 = vector.broadcast %cst_12 : f32 to vector<32x768xf32>
    %16 = arith.maximumf %14, %15 : vector<32x768xf32>
    %c8 = arith.constant 8 : index
    %c0_13 = arith.constant 0 : index
    %17 = vector.load %arg1[%c8, %c0_13] : memref<16x896xf32, #tpu.memory_space<vmem>>, vector<8x768xf32>
    %18 = tpu.transpose %16, [1, 0] : vector<32x768xf32> -> vector<768x32xf32>
    %cst_14 = arith.constant dense<0.000000e+00> : vector<8x32xf32>
    %19 = tpu.matmul %17, %18, %cst_14 {dimension_numbers = #tpu.dot_dimension_numbers<[1], [0], [0], [1], [0, 0, 1, 1], [], []>} : vector<8x768xf32>, vector<768x32xf32>, vector<8x32xf32> -> vector<8x32xf32>
    %c64 = arith.constant 64 : index
    %c0_15 = arith.constant 0 : index
    %20 = vector.load %arg2[%c64, %c0_15] : memref<168x128xf32, #tpu.memory_space<vmem>>, vector<32x32xf32>
    %c96 = arith.constant 96 : index
    %c0_16 = arith.constant 0 : index
    %21 = vector.load %arg2[%c96, %c0_16] : memref<168x128xf32, #tpu.memory_space<vmem>>, vector<32x32xf32>
    %c128 = arith.constant 128 : index
    %c0_17 = arith.constant 0 : index
    %22 = vector.load %arg2[%c128, %c0_17] : memref<168x128xf32, #tpu.memory_space<vmem>>, vector<32x128xf32>
    %c160 = arith.constant 160 : index
    %c0_18 = arith.constant 0 : index
    %23 = vector.load %arg2[%c160, %c0_18] : memref<168x128xf32, #tpu.memory_space<vmem>>, vector<1x32xf32>
    %c161 = arith.constant 161 : index
    %c0_19 = arith.constant 0 : index
    %24 = vector.load %arg2[%c161, %c0_19] : memref<168x128xf32, #tpu.memory_space<vmem>>, vector<1x32xf32>
    %c162 = arith.constant 162 : index
    %c0_20 = arith.constant 0 : index
    %25 = vector.load %arg2[%c162, %c0_20] : memref<168x128xf32, #tpu.memory_space<vmem>>, vector<1x128xf32>
    %cst_21 = arith.constant dense<0.000000e+00> : vector<8x32xf32>
    %26 = tpu.matmul %19, %20, %cst_21 {dimension_numbers = #tpu.dot_dimension_numbers<[1], [0], [0], [1], [0, 0, 1, 1], [], []>} : vector<8x32xf32>, vector<32x32xf32>, vector<8x32xf32> -> vector<8x32xf32>
    %27 = vector.broadcast %23 : vector<1x32xf32> to vector<8x32xf32>
    %28 = arith.addf %26, %27 : vector<8x32xf32>
    %cst_22 = arith.constant 0.000000e+00 : f32
    %29 = vector.broadcast %cst_22 : f32 to vector<8x32xf32>
    %30 = arith.maximumf %28, %29 : vector<8x32xf32>
    %cst_23 = arith.constant dense<0.000000e+00> : vector<8x32xf32>
    %31 = tpu.matmul %30, %21, %cst_23 {dimension_numbers = #tpu.dot_dimension_numbers<[1], [0], [0], [1], [0, 0, 1, 1], [], []>} : vector<8x32xf32>, vector<32x32xf32>, vector<8x32xf32> -> vector<8x32xf32>
    %32 = vector.broadcast %24 : vector<1x32xf32> to vector<8x32xf32>
    %33 = arith.addf %31, %32 : vector<8x32xf32>
    %cst_24 = arith.constant 0.000000e+00 : f32
    %34 = vector.broadcast %cst_24 : f32 to vector<8x32xf32>
    %35 = arith.maximumf %33, %34 : vector<8x32xf32>
    %cst_25 = arith.constant dense<0.000000e+00> : vector<8x128xf32>
    %36 = tpu.matmul %35, %22, %cst_25 {dimension_numbers = #tpu.dot_dimension_numbers<[1], [0], [0], [1], [0, 0, 1, 1], [], []>} : vector<8x32xf32>, vector<32x128xf32>, vector<8x128xf32> -> vector<8x128xf32>
    %37 = vector.broadcast %25 : vector<1x128xf32> to vector<8x128xf32>
    %38 = arith.addf %36, %37 : vector<8x128xf32>
    %c0_26 = arith.constant 0 : index
    %c0_27 = arith.constant 0 : index
    %39 = vector.load %arg3[%c0_26, %c0_27] : memref<8x128xf32, #tpu.memory_space<vmem>>, vector<8x128xf32>
    tpu.vector_store %arg3[%c0_26, %c0_27], %38 {strides = array<i32>} : memref<8x128xf32, #tpu.memory_space<vmem>>, vector<8x128xf32>,
    return
  }
  func.func @transform_0(%arg0: i32) -> (i32, i32) {
    %c0_i32 = arith.constant 0 : i32
    %c0_i32_0 = arith.constant 0 : i32
    %c0_i32_1 = arith.constant 0 : i32
    return %c0_i32, %c0_i32_0 : i32, i32
  }
  func.func @transform_1(%arg0: i32) -> (i32, i32) {
    %c0_i32 = arith.constant 0 : i32
    %c0_i32_0 = arith.constant 0 : i32
    %c0_i32_1 = arith.constant 0 : i32
    return %c0_i32, %c0_i32_0 : i32, i32
  }
  func.func @transform_2(%arg0: i32) -> (i32, i32) {
    %c0_i32 = arith.constant 0 : i32
    %c0_i32_0 = arith.constant 0 : i32
    %c0_i32_1 = arith.constant 0 : i32
    return %c0_i32, %c0_i32_0 : i32, i32
  }
}

</mosaic_0001>

<llo_original>
// kernel: metos_regressor_forward.1
$region0: #{metos_regressor_forward.1}
  #allocation0 [shape = 'u32[]', space=smem, size = 0x4, offset = 0x4, fixed_abs, tag = 'smem constant byte address 0x4 - core index']
  #allocation1 [shape = 'u32[72,128]{1,0:T(1,128)}', space=vmem, size = 0x9000, scoped, tag = 'internal scratch']
  %s0 = inlined_call_operand.vmem [shape: f32[16,896], index: 0, kind: input, shape index: {}]
  %s1 = inlined_call_operand.vmem [shape: f32[168,128], index: 1, kind: input, shape index: {}]
  %s2 = inlined_call_operand.vmem [shape: f32[8,128], index: 2, kind: output, shape index: {}]
  %s3 = sld [smem:[#allocation0]]
  $region18: #{metos_regressor_forward.1} parent=0
    _
  %s5 = ssub.s32 1, %s3
  %s6 = scalar_select 0, %s5, %s3
  // Predicated region
  $region2: #{metos_regressor_forward.1} parent=0 // pred_check
    _
  $region3: #{metos_regressor_forward.1} parent=0 // pred_check_branch
    %8 = sbr.rel (0) target = $region5
  $region4: #{metos_regressor_forward.1} parent=0 // pred_region
    _
  $region5: #{metos_regressor_forward.1} parent=0 // pred_fallthru
    _
  // Predicated region
  $region6: #{metos_regressor_forward.1} parent=0 // pred_check
    _
  $region7: #{metos_regressor_forward.1} parent=0 // pred_check_branch
    %10 = sbr.rel (0) target = $region9
  $region8: #{metos_regressor_forward.1} parent=0 // pred_region
    _
  $region9: #{metos_regressor_forward.1} parent=0 // pred_fallthru
    _
  %v11 = vld [vmem:[%s0] sm:$0xff]
  %v12 = vld [vmem:[%s0 + $0x8] sm:$0xff]
  %v13 = vld [vmem:[%s0 + $0x10] sm:$0xff]
  %v14 = vld [vmem:[%s0 + $0x18] sm:$0xff]
  %v15 = vld [vmem:[%s0 + $0x20] sm:$0xff]
  %v16 = vld [vmem:[%s0 + $0x28] sm:$0xff]
  %v17 = vld [vmem:[%s0 + $0x30] sm:$0xff]
  %25 = vrot.lane.b32.xlu0 %v11, 127
  %v26 = vpop.permute.xlu0 %25
  %27 = vrot.lane.b32.xlu0 %v12, 127
  %v28 = vpop.permute.xlu0 %27
  %29 = vrot.lane.b32.xlu0 %v13, 127
  %v30 = vpop.permute.xlu0 %29
  %31 = vrot.lane.b32.xlu0 %v14, 127
  %v32 = vpop.permute.xlu0 %31
  %33 = vrot.lane.b32.xlu0 %v15, 127
  %v34 = vpop.permute.xlu0 %33
  %35 = vrot.lane.b32.xlu0 %v16, 127
  %v36 = vpop.permute.xlu0 %35
  %37 = vrot.lane.b32.xlu0 %v17, 127
  %v38 = vpop.permute.xlu0 %37
  %vm39 = vcmask 1039360
  %v40 = vsel %vm39, %v26, %v28
  %v41 = vsel %vm39, %v28, %v30
  %v42 = vsel %vm39, %v30, %v32
  %v43 = vsel %vm39, %v32, %v34
  %v44 = vsel %vm39, %v34, %v36
  %v45 = vsel %vm39, %v36, %v38
  %52 = vrot.lane.b32.xlu0 %v11, 126
  %v53 = vpop.permute.xlu0 %52
  %54 = vrot.lane.b32.xlu0 %v12, 126
  %v55 = vpop.permute.xlu0 %54
  %56 = vrot.lane.b32.xlu0 %v13, 126
  %v57 = vpop.permute.xlu0 %56
  %58 = vrot.lane.b32.xlu0 %v14, 126
  %v59 = vpop.permute.xlu0 %58
  %60 = vrot.lane.b32.xlu0 %v15, 126
  %v61 = vpop.permute.xlu0 %60
  %62 = vrot.lane.b32.xlu0 %v16, 126
  %v63 = vpop.permute.xlu0 %62
  %64 = vrot.lane.b32.xlu0 %v17, 126
  %v65 = vpop.permute.xlu0 %64
  %vm66 = vcmask 1031168
  %v67 = vsel %vm66, %v53, %v55
  %v68 = vsel %vm66, %v55, %v57
  %v69 = vsel %vm66, %v57, %v59
  %v70 = vsel %vm66, %v59, %v61
  %v71 = vsel %vm66, %v61, %v63
  %v72 = vsel %vm66, %v63, %v65
  %79 = vrot.lane.b32.xlu0 %v11, 110
  %v80 = vpop.permute.xlu0 %79
  %81 = vrot.lane.b32.xlu0 %v12, 110
  %v82 = vpop.permute.xlu0 %81
  %83 = vrot.lane.b32.xlu0 %v13, 110
  %v84 = vpop.permute.xlu0 %83
  %85 = vrot.lane.b32.xlu0 %v14, 110
  %v86 = vpop.permute.xlu0 %85
  %87 = vrot.lane.b32.xlu0 %v15, 110
  %v88 = vpop.permute.xlu0 %87
  %89 = vrot.lane.b32.xlu0 %v16, 110
  %v90 = vpop.permute.xlu0 %89
  %91 = vrot.lane.b32.xlu0 %v17, 110
  %v92 = vpop.permute.xlu0 %91
  %vm93 = vcmask 900096
  %v94 = vsel %vm93, %v80, %v82
  %v95 = vsel %vm93, %v82, %v84
  %v96 = vsel %vm93, %v84, %v86
  %v97 = vsel %vm93, %v86, %v88
  %v98 = vsel %vm93, %v88, %v90
  %v99 = vsel %vm93, %v90, %v92
  %106 = vrot.lane.b32.xlu0 %v11, 109
  %v107 = vpop.permute.xlu0 %106
  %108 = vrot.lane.b32.xlu0 %v12, 109
  %v109 = vpop.permute.xlu0 %108
  %110 = vrot.lane.b32.xlu0 %v13, 109
  %v111 = vpop.permute.xlu0 %110
  %112 = vrot.lane.b32.xlu0 %v14, 109
  %v113 = vpop.permute.xlu0 %112
  %114 = vrot.lane.b32.xlu0 %v15, 109
  %v115 = vpop.permute.xlu0 %114
  %116 = vrot.lane.b32.xlu0 %v16, 109
  %v117 = vpop.permute.xlu0 %116
  %118 = vrot.lane.b32.xlu0 %v17, 109
  %v119 = vpop.permute.xlu0 %118
  %vm120 = vcmask 891904
  %v121 = vsel %vm120, %v107, %v109
  %v122 = vsel %vm120, %v109, %v111
  %v123 = vsel %vm120, %v111, %v113
  %v124 = vsel %vm120, %v113, %v115
  %v125 = vsel %vm120, %v115, %v117
  %v126 = vsel %vm120, %v117, %v119
  %133 = vrot.lane.b32.xlu0 %v11, 108
  %v134 = vpop.permute.xlu0 %133
  %135 = vrot.lane.b32.xlu0 %v12, 108
  %v136 = vpop.permute.xlu0 %135
  %137 = vrot.lane.b32.xlu0 %v13, 108
  %v138 = vpop.permute.xlu0 %137
  %139 = vrot.lane.b32.xlu0 %v14, 108
  %v140 = vpop.permute.xlu0 %139
  %141 = vrot.lane.b32.xlu0 %v15, 108
  %v142 = vpop.permute.xlu0 %141
  %143 = vrot.lane.b32.xlu0 %v16, 108
  %v144 = vpop.permute.xlu0 %143
  %145 = vrot.lane.b32.xlu0 %v17, 108
  %v146 = vpop.permute.xlu0 %145
  %vm147 = vcmask 883712
  %v148 = vsel %vm147, %v134, %v136
  %v149 = vsel %vm147, %v136, %v138
  %v150 = vsel %vm147, %v138, %v140
  %v151 = vsel %vm147, %v140, %v142
  %v152 = vsel %vm147, %v142, %v144
  %v153 = vsel %vm147, %v144, %v146
  %160 = vrot.lane.b32.xlu0 %v11, 92
  %v161 = vpop.permute.xlu0 %160
  %162 = vrot.lane.b32.xlu0 %v12, 92
  %v163 = vpop.permute.xlu0 %162
  %164 = vrot.lane.b32.xlu0 %v13, 92
  %v165 = vpop.permute.xlu0 %164
  %166 = vrot.lane.b32.xlu0 %v14, 92
  %v167 = vpop.permute.xlu0 %166
  %168 = vrot.lane.b32.xlu0 %v15, 92
  %v169 = vpop.permute.xlu0 %168
  %170 = vrot.lane.b32.xlu0 %v16, 92
  %v171 = vpop.permute.xlu0 %170
  %172 = vrot.lane.b32.xlu0 %v17, 92
  %v173 = vpop.permute.xlu0 %172
  %vm174 = vcmask 752640
  %v175 = vsel %vm174, %v161, %v163
  %v176 = vsel %vm174, %v163, %v165
  %v177 = vsel %vm174, %v165, %v167
  %v178 = vsel %vm174, %v167, %v169
  %v179 = vsel %vm174, %v169, %v171
  %v180 = vsel %vm174, %v171, %v173
  %187 = vrot.lane.b32.xlu0 %v11, 91
  %v188 = vpop.permute.xlu0 %187
  %189 = vrot.lane.b32.xlu0 %v12, 91
  %v190 = vpop.permute.xlu0 %189
  %191 = vrot.lane.b32.xlu0 %v13, 91
  %v192 = vpop.permute.xlu0 %191
  %193 = vrot.lane.b32.xlu0 %v14, 91
  %v194 = vpop.permute.xlu0 %193
  %195 = vrot.lane.b32.xlu0 %v15, 91
  %v196 = vpop.permute.xlu0 %195
  %197 = vrot.lane.b32.xlu0 %v16, 91
  %v198 = vpop.permute.xlu0 %197
  %199 = vrot.lane.b32.xlu0 %v17, 91
  %v200 = vpop.permute.xlu0 %199
  %vm201 = vcmask 744448
  %v202 = vsel %vm201, %v188, %v190
  %v203 = vsel %vm201, %v190, %v192
  %v204 = vsel %vm201, %v192, %v194
  %v205 = vsel %vm201, %v194, %v196
  %v206 = vsel %vm201, %v196, %v198
  %v207 = vsel %vm201, %v198, %v200
  %214 = vrot.lane.b32.xlu0 %v11, 90
  %v215 = vpop.permute.xlu0 %214
  %216 = vrot.lane.b32.xlu0 %v12, 90
  %v217 = vpop.permute.xlu0 %216
  %218 = vrot.lane.b32.xlu0 %v13, 90
  %v219 = vpop.permute.xlu0 %218
  %220 = vrot.lane.b32.xlu0 %v14, 90
  %v221 = vpop.permute.xlu0 %220
  %222 = vrot.lane.b32.xlu0 %v15, 90
  %v223 = vpop.permute.xlu0 %222
  %224 = vrot.lane.b32.xlu0 %v16, 90
  %v225 = vpop.permute.xlu0 %224
  %226 = vrot.lane.b32.xlu0 %v17, 90
  %v227 = vpop.permute.xlu0 %226
  %vm228 = vcmask 736256
  %v229 = vsel %vm228, %v215, %v217
  %v230 = vsel %vm228, %v217, %v219
  %v231 = vsel %vm228, %v219, %v221
  %v232 = vsel %vm228, %v221, %v223
  %v233 = vsel %vm228, %v223, %v225
  %v234 = vsel %vm228, %v225, %v227
  %v241 = vld [vmem:[%s1] sm:$0xff]
  %v242 = vld [vmem:[%s1 + $0x8] sm:$0xff]
  %v243 = vld [vmem:[%s1 + $0x10] sm:$0xff]
  %v244 = vld [vmem:[%s1 + $0x18] sm:$0xff]
  %v245 = vld [vmem:[%s1 + $0x20] sm:$0xff]
  %v246 = vld [vmem:[%s1 + $0x28] sm:$0xff]
  %v247 = vld [vmem:[%s1 + $0x30] sm:$0xff]
  %v248 = vld [vmem:[%s1 + $0x38] sm:$0xff]
  %250 = vset.pattern.permute.xlu0 0
  %251 = vperm.xlu0 %250, %v245
  %v252 = vpop.permute.xlu0 %251
  %255 = vset.pattern.permute.xlu0 0
  %256 = vperm.xlu0 %255, %v246
  %v257 = vpop.permute.xlu0 %256
  %260 = vset.pattern.permute.xlu0 0
  %261 = vperm.xlu0 %260, %v247
  %v262 = vpop.permute.xlu0 %261
  %265 = vset.pattern.permute.xlu0 0
  %266 = vperm.xlu0 %265, %v248
  %v267 = vpop.permute.xlu0 %266
  %vm269 = vcmask 588800
  %v271 = vsel %vm269, %v241, 0
  %v274 = vsel %vm269, %v242, 0
  %v277 = vsel %vm269, %v243, 0
  %v280 = vsel %vm269, %v244, 0
  %282 = vmatpush.msra.mxu0 0.0
  %283 = vmatpush.msra.mxu0 0.0
  %284 = vmatpush.msra.mxu0 0.0
  %285 = vmatpush.msra.mxu0 0.0
  %286 = vmatpush.msra.mxu0 0.0
  %287 = vmatpush.msra.mxu0 0.0
  %288 = vmatpush.msra.mxu0 0.0
  %289 = vmatpush.msra.mxu0 %v229
  %290 = vmatpush.msra.mxu0 %v202
  %291 = vmatpush.msra.mxu0 %v175
  %292 = vmatpush.msra.mxu0 %v148
  %293 = vmatpush.msra.mxu0 %v121
  %294 = vmatpush.msra.mxu0 %v94
  %295 = vmatpush.msra.mxu0 %v67
  %296 = vmatpush.msra.mxu0 %v40
  %297 = vmatpush.msra.mxu0 %v11
  %298 = vmatmul.f32.gmra.mxu0 %v271
  %v299 = vpop.f32.mrf.mxu0
  %v300 = vadd.f32 %v252, %v299
  %301 = vmatmul.f32.gmra.mxu0 %v274
  %v302 = vpop.f32.mrf.mxu0
  %v303 = vadd.f32 %v257, %v302
  %304 = vmatmul.f32.gmra.mxu0 %v277
  %v305 = vpop.f32.mrf.mxu0
  %v306 = vadd.f32 %v262, %v305
  %307 = vmatmul.f32.gmra.mxu0 %v280
  %v308 = vpop.f32.mrf.mxu0
  %v309 = vadd.f32 %v267, %v308
  %310 = vdwg.mxu0
  %311 = vmatpush.msra.mxu0 0.0
  %312 = vmatpush.msra.mxu0 0.0
  %313 = vmatpush.msra.mxu0 0.0
  %314 = vmatpush.msra.mxu0 0.0
  %315 = vmatpush.msra.mxu0 0.0
  %316 = vmatpush.msra.mxu0 0.0
  %317 = vmatpush.msra.mxu0 0.0
  %318 = vmatpush.msra.mxu0 %v230
  %319 = vmatpush.msra.mxu0 %v203
  %320 = vmatpush.msra.mxu0 %v176
  %321 = vmatpush.msra.mxu0 %v149
  %322 = vmatpush.msra.mxu0 %v122
  %323 = vmatpush.msra.mxu0 %v95
  %324 = vmatpush.msra.mxu0 %v68
  %325 = vmatpush.msra.mxu0 %v41
  %326 = vmatpush.msra.mxu0 %v12
  %327 = vmatmul.f32.gmra.mxu0 %v271
  %v328 = vpop.f32.mrf.mxu0
  %v329 = vadd.f32 %v252, %v328
  %330 = vmatmul.f32.gmra.mxu0 %v274
  %v331 = vpop.f32.mrf.mxu0
  %v332 = vadd.f32 %v257, %v331
  %333 = vmatmul.f32.gmra.mxu0 %v277
  %v334 = vpop.f32.mrf.mxu0
  %v335 = vadd.f32 %v262, %v334
  %336 = vmatmul.f32.gmra.mxu0 %v280
  %v337 = vpop.f32.mrf.mxu0
  %v338 = vadd.f32 %v267, %v337
  %339 = vdwg.mxu0
  %340 = vmatpush.msra.mxu0 0.0
  %341 = vmatpush.msra.mxu0 0.0
  %342 = vmatpush.msra.mxu0 0.0
  %343 = vmatpush.msra.mxu0 0.0
  %344 = vmatpush.msra.mxu0 0.0
  %345 = vmatpush.msra.mxu0 0.0
  %346 = vmatpush.msra.mxu0 0.0
  %347 = vmatpush.msra.mxu0 %v231
  %348 = vmatpush.msra.mxu0 %v204
  %349 = vmatpush.msra.mxu0 %v177
  %350 = vmatpush.msra.mxu0 %v150
  %351 = vmatpush.msra.mxu0 %v123
  %352 = vmatpush.msra.mxu0 %v96
  %353 = vmatpush.msra.mxu0 %v69
  %354 = vmatpush.msra.mxu0 %v42
  %355 = vmatpush.msra.mxu0 %v13
  %356 = vmatmul.f32.gmra.mxu0 %v271
  %v357 = vpop.f32.mrf.mxu0
  %v358 = vadd.f32 %v252, %v357
  %359 = vmatmul.f32.gmra.mxu0 %v274
  %v360 = vpop.f32.mrf.mxu0
  %v361 = vadd.f32 %v257, %v360
  %362 = vmatmul.f32.gmra.mxu0 %v277
  %v363 = vpop.f32.mrf.mxu0
  %v364 = vadd.f32 %v262, %v363
  %365 = vmatmul.f32.gmra.mxu0 %v280
  %v366 = vpop.f32.mrf.mxu0
  %v367 = vadd.f32 %v267, %v366
  %368 = vdwg.mxu0
  %369 = vmatpush.msra.mxu0 0.0
  %370 = vmatpush.msra.mxu0 0.0
  %371 = vmatpush.msra.mxu0 0.0
  %372 = vmatpush.msra.mxu0 0.0
  %373 = vmatpush.msra.mxu0 0.0
  %374 = vmatpush.msra.mxu0 0.0
  %375 = vmatpush.msra.mxu0 0.0
  %376 = vmatpush.msra.mxu0 %v232
  %377 = vmatpush.msra.mxu0 %v205
  %378 = vmatpush.msra.mxu0 %v178
  %379 = vmatpush.msra.mxu0 %v151
  %380 = vmatpush.msra.mxu0 %v124
  %381 = vmatpush.msra.mxu0 %v97
  %382 = vmatpush.msra.mxu0 %v70
  %383 = vmatpush.msra.mxu0 %v43
  %384 = vmatpush.msra.mxu0 %v14
  %385 = vmatmul.f32.gmra.mxu0 %v271
  %v386 = vpop.f32.mrf.mxu0
  %v387 = vadd.f32 %v252, %v386
  %388 = vmatmul.f32.gmra.mxu0 %v274
  %v389 = vpop.f32.mrf.mxu0
  %v390 = vadd.f32 %v257, %v389
  %391 = vmatmul.f32.gmra.mxu0 %v277
  %v392 = vpop.f32.mrf.mxu0
  %v393 = vadd.f32 %v262, %v392
  %394 = vmatmul.f32.gmra.mxu0 %v280
  %v395 = vpop.f32.mrf.mxu0
  %v396 = vadd.f32 %v267, %v395
  %397 = vdwg.mxu0
  %398 = vmatpush.msra.mxu0 0.0
  %399 = vmatpush.msra.mxu0 0.0
  %400 = vmatpush.msra.mxu0 0.0
  %401 = vmatpush.msra.mxu0 0.0
  %402 = vmatpush.msra.mxu0 0.0
  %403 = vmatpush.msra.mxu0 0.0
  %404 = vmatpush.msra.mxu0 0.0
  %405 = vmatpush.msra.mxu0 %v233
  %406 = vmatpush.msra.mxu0 %v206
  %407 = vmatpush.msra.mxu0 %v179
  %408 = vmatpush.msra.mxu0 %v152
  %409 = vmatpush.msra.mxu0 %v125
  %410 = vmatpush.msra.mxu0 %v98
  %411 = vmatpush.msra.mxu0 %v71
  %412 = vmatpush.msra.mxu0 %v44
  %413 = vmatpush.msra.mxu0 %v15
  %414 = vmatmul.f32.gmra.mxu0 %v271
  %v415 = vpop.f32.mrf.mxu0
  %v416 = vadd.f32 %v252, %v415
  %417 = vmatmul.f32.gmra.mxu0 %v274
  %v418 = vpop.f32.mrf.mxu0
  %v419 = vadd.f32 %v257, %v418
  %420 = vmatmul.f32.gmra.mxu0 %v277
  %v421 = vpop.f32.mrf.mxu0
  %v422 = vadd.f32 %v262, %v421
  %423 = vmatmul.f32.gmra.mxu0 %v280
  %v424 = vpop.f32.mrf.mxu0
  %v425 = vadd.f32 %v267, %v424
  %426 = vdwg.mxu0
  %427 = vmatpush.msra.mxu0 0.0
  %428 = vmatpush.msra.mxu0 0.0
  %429 = vmatpush.msra.mxu0 0.0
  %430 = vmatpush.msra.mxu0 0.0
  %431 = vmatpush.msra.mxu0 0.0
  %432 = vmatpush.msra.mxu0 0.0
  %433 = vmatpush.msra.mxu0 0.0
  %434 = vmatpush.msra.mxu0 %v234
  %435 = vmatpush.msra.mxu0 %v207
  %436 = vmatpush.msra.mxu0 %v180
  %437 = vmatpush.msra.mxu0 %v153
  %438 = vmatpush.msra.mxu0 %v126
  %439 = vmatpush.msra.mxu0 %v99
  %440 = vmatpush.msra.mxu0 %v72
  %441 = vmatpush.msra.mxu0 %v45
  %442 = vmatpush.msra.mxu0 %v16
  %443 = vmatmul.f32.gmra.mxu0 %v271
  %v444 = vpop.f32.mrf.mxu0
  %v445 = vadd.f32 %v252, %v444
  %446 = vmatmul.f32.gmra.mxu0 %v274
  %v447 = vpop.f32.mrf.mxu0
  %v448 = vadd.f32 %v257, %v447
  %449 = vmatmul.f32.gmra.mxu0 %v277
  %v450 = vpop.f32.mrf.mxu0
  %v451 = vadd.f32 %v262, %v450
  %452 = vmatmul.f32.gmra.mxu0 %v280
  %v453 = vpop.f32.mrf.mxu0
  %v454 = vadd.f32 %v267, %v453
  %455 = vdwg.mxu0
  %v456 = vmax.f32 %v300, 0.0
  %v457 = vmax.f32 %v329, 0.0
  %v458 = vmax.f32 %v358, 0.0
  %v459 = vmax.f32 %v387, 0.0
  %v460 = vmax.f32 %v416, 0.0
  %v461 = vmax.f32 %v445, 0.0
  %v462 = vmax.f32 %v303, 0.0
  %v463 = vmax.f32 %v332, 0.0
  %v464 = vmax.f32 %v361, 0.0
  %v465 = vmax.f32 %v390, 0.0
  %v466 = vmax.f32 %v419, 0.0
  %v467 = vmax.f32 %v448, 0.0
  %v468 = vmax.f32 %v306, 0.0
  %v469 = vmax.f32 %v335, 0.0
  %v470 = vmax.f32 %v364, 0.0
  %v471 = vmax.f32 %v393, 0.0
  %v472 = vmax.f32 %v422, 0.0
  %v473 = vmax.f32 %v451, 0.0
  %v474 = vmax.f32 %v309, 0.0
  %v475 = vmax.f32 %v338, 0.0
  %v476 = vmax.f32 %v367, 0.0
  %v477 = vmax.f32 %v396, 0.0
  %v478 = vmax.f32 %v425, 0.0
  %v479 = vmax.f32 %v454, 0.0
  %v480 = vld [vmem:[%s0 + $0x38] sm:$0xff]
  %v481 = vld [vmem:[%s0 + $0x40] sm:$0xff]
  %v482 = vld [vmem:[%s0 + $0x48] sm:$0xff]
  %v483 = vld [vmem:[%s0 + $0x50] sm:$0xff]
  %v484 = vld [vmem:[%s0 + $0x58] sm:$0xff]
  %v485 = vld [vmem:[%s0 + $0x60] sm:$0xff]
  %486 = vmatpush.xpose.msra.mxu0 0.0
  %487 = vmatpush.xpose.msra.mxu0 0.0
  %488 = vmatpush.xpose.msra.mxu0 0.0
  %489 = vmatpush.xpose.msra.mxu0 0.0
  %490 = vmatpush.xpose.msra.mxu0 0.0
  %491 = vmatpush.xpose.msra.mxu0 0.0
  %492 = vmatpush.xpose.msra.mxu0 0.0
  %493 = vmatpush.xpose.msra.mxu0 0.0
  %494 = vmatpush.xpose.msra.mxu0 0.0
  %495 = vmatpush.xpose.msra.mxu0 0.0
  %496 = vmatpush.xpose.msra.mxu0 0.0
  %497 = vmatpush.xpose.msra.mxu0 0.0
  %498 = vmatpush.xpose.msra.mxu0 %v474
  %499 = vmatpush.xpose.msra.mxu0 %v468
  %500 = vmatpush.xpose.msra.mxu0 %v462
  %501 = vmatpush.xpose.msra.mxu0 %v456
  %502 = vmatmul.f32.gmra.mxu0 %v480
  %v503 = vpop.f32.mrf.mxu0
  %v504 = vadd.f32 0.0, %v503
  %505 = vdwg.mxu0
  %506 = vmatpush.xpose.msra.mxu0 0.0
  %507 = vmatpush.xpose.msra.mxu0 0.0
  %508 = vmatpush.xpose.msra.mxu0 0.0
  %509 = vmatpush.xpose.msra.mxu0 0.0
  %510 = vmatpush.xpose.msra.mxu0 0.0
  %511 = vmatpush.xpose.msra.mxu0 0.0
  %512 = vmatpush.xpose.msra.mxu0 0.0
  %513 = vmatpush.xpose.msra.mxu0 0.0
  %514 = vmatpush.xpose.msra.mxu0 0.0
  %515 = vmatpush.xpose.msra.mxu0 0.0
  %516 = vmatpush.xpose.msra.mxu0 0.0
  %517 = vmatpush.xpose.msra.mxu0 0.0
  %518 = vmatpush.xpose.msra.mxu0 %v475
  %519 = vmatpush.xpose.msra.mxu0 %v469
  %520 = vmatpush.xpose.msra.mxu0 %v463
  %521 = vmatpush.xpose.msra.mxu0 %v457
  %522 = vmatmul.f32.gmra.mxu0 %v481
  %v523 = vpop.f32.mrf.mxu0
  %v524 = vadd.f32 %v504, %v523
  %525 = vdwg.mxu0
  %526 = vmatpush.xpose.msra.mxu0 0.0
  %527 = vmatpush.xpose.msra.mxu0 0.0
  %528 = vmatpush.xpose.msra.mxu0 0.0
  %529 = vmatpush.xpose.msra.mxu0 0.0
  %530 = vmatpush.xpose.msra.mxu0 0.0
  %531 = vmatpush.xpose.msra.mxu0 0.0
  %532 = vmatpush.xpose.msra.mxu0 0.0
  %533 = vmatpush.xpose.msra.mxu0 0.0
  %534 = vmatpush.xpose.msra.mxu0 0.0
  %535 = vmatpush.xpose.msra.mxu0 0.0
  %536 = vmatpush.xpose.msra.mxu0 0.0
  %537 = vmatpush.xpose.msra.mxu0 0.0
  %538 = vmatpush.xpose.msra.mxu0 %v476
  %539 = vmatpush.xpose.msra.mxu0 %v470
  %540 = vmatpush.xpose.msra.mxu0 %v464
  %541 = vmatpush.xpose.msra.mxu0 %v458
  %542 = vmatmul.f32.gmra.mxu0 %v482
  %v543 = vpop.f32.mrf.mxu0
  %v544 = vadd.f32 %v524, %v543
  %545 = vdwg.mxu0
  %546 = vmatpush.xpose.msra.mxu0 0.0
  %547 = vmatpush.xpose.msra.mxu0 0.0
  %548 = vmatpush.xpose.msra.mxu0 0.0
  %549 = vmatpush.xpose.msra.mxu0 0.0
  %550 = vmatpush.xpose.msra.mxu0 0.0
  %551 = vmatpush.xpose.msra.mxu0 0.0
  %552 = vmatpush.xpose.msra.mxu0 0.0
  %553 = vmatpush.xpose.msra.mxu0 0.0
  %554 = vmatpush.xpose.msra.mxu0 0.0
  %555 = vmatpush.xpose.msra.mxu0 0.0
  %556 = vmatpush.xpose.msra.mxu0 0.0
  %557 = vmatpush.xpose.msra.mxu0 0.0
  %558 = vmatpush.xpose.msra.mxu0 %v477
  %559 = vmatpush.xpose.msra.mxu0 %v471
  %560 = vmatpush.xpose.msra.mxu0 %v465
  %561 = vmatpush.xpose.msra.mxu0 %v459
  %562 = vmatmul.f32.gmra.mxu0 %v483
  %v563 = vpop.f32.mrf.mxu0
  %v564 = vadd.f32 %v544, %v563
  %565 = vdwg.mxu0
  %566 = vmatpush.xpose.msra.mxu0 0.0
  %567 = vmatpush.xpose.msra.mxu0 0.0
  %568 = vmatpush.xpose.msra.mxu0 0.0
  %569 = vmatpush.xpose.msra.mxu0 0.0
  %570 = vmatpush.xpose.msra.mxu0 0.0
  %571 = vmatpush.xpose.msra.mxu0 0.0
  %572 = vmatpush.xpose.msra.mxu0 0.0
  %573 = vmatpush.xpose.msra.mxu0 0.0
  %574 = vmatpush.xpose.msra.mxu0 0.0
  %575 = vmatpush.xpose.msra.mxu0 0.0
  %576 = vmatpush.xpose.msra.mxu0 0.0
  %577 = vmatpush.xpose.msra.mxu0 0.0
  %578 = vmatpush.xpose.msra.mxu0 %v478
  %579 = vmatpush.xpose.msra.mxu0 %v472
  %580 = vmatpush.xpose.msra.mxu0 %v466
  %581 = vmatpush.xpose.msra.mxu0 %v460
  %582 = vmatmul.f32.gmra.mxu0 %v484
  %v583 = vpop.f32.mrf.mxu0
  %v584 = vadd.f32 %v564, %v583
  %585 = vdwg.mxu0
  %586 = vmatpush.xpose.msra.mxu0 0.0
  %587 = vmatpush.xpose.msra.mxu0 0.0
  %588 = vmatpush.xpose.msra.mxu0 0.0
  %589 = vmatpush.xpose.msra.mxu0 0.0
  %590 = vmatpush.xpose.msra.mxu0 0.0
  %591 = vmatpush.xpose.msra.mxu0 0.0
  %592 = vmatpush.xpose.msra.mxu0 0.0
  %593 = vmatpush.xpose.msra.mxu0 0.0
  %594 = vmatpush.xpose.msra.mxu0 0.0
  %595 = vmatpush.xpose.msra.mxu0 0.0
  %596 = vmatpush.xpose.msra.mxu0 0.0
  %597 = vmatpush.xpose.msra.mxu0 0.0
  %598 = vmatpush.xpose.msra.mxu0 %v479
  %599 = vmatpush.xpose.msra.mxu0 %v473
  %600 = vmatpush.xpose.msra.mxu0 %v467
  %601 = vmatpush.xpose.msra.mxu0 %v461
  %602 = vmatmul.f32.gmra.mxu0 %v485
  %v603 = vpop.f32.mrf.mxu0
  %v604 = vadd.f32 %v584, %v603
  %605 = vdwg.mxu0
  %v606 = vld [vmem:[%s1 + $0x40] sm:$0xff]
  %v607 = vld [vmem:[%s1 + $0x48] sm:$0xff]
  %v608 = vld [vmem:[%s1 + $0x50] sm:$0xff]
  %v609 = vld [vmem:[%s1 + $0x58] sm:$0xff]
  %v610 = vld [vmem:[%s1 + $0x60] sm:$0xff]
  %v611 = vld [vmem:[%s1 + $0x68] sm:$0xff]
  %v612 = vld [vmem:[%s1 + $0x70] sm:$0xff]
  %v613 = vld [vmem:[%s1 + $0x78] sm:$0xff]
  %v614 = vld [vmem:[%s1 + $0x80] sm:$0xff]
  %v615 = vld [vmem:[%s1 + $0x88] sm:$0xff]
  %v616 = vld [vmem:[%s1 + $0x90] sm:$0xff]
  %v617 = vld [vmem:[%s1 + $0x98] sm:$0xff]
  %v618 = vld [vmem:[%s1 + $0xa0] sm:$0x1]
  %v619 = vld [vmem:[%s1 + $0xa1] sm:$0x1]
  %v620 = vld [vmem:[%s1 + $0xa2] sm:$0x1]
  %v621 = vperm.slane %v618, 0
  %vm622 = vcmask 261120
  %v624 = vsel %vm622, %v604, 0
  %626 = vmatpush.msra.mxu0 0.0
  %627 = vmatpush.msra.mxu0 0.0
  %628 = vmatpush.msra.mxu0 0.0
  %629 = vmatpush.msra.mxu0 0.0
  %630 = vmatpush.msra.mxu0 0.0
  %631 = vmatpush.msra.mxu0 0.0
  %632 = vmatpush.msra.mxu0 0.0
  %633 = vmatpush.msra.mxu0 0.0
  %634 = vmatpush.msra.mxu0 0.0
  %635 = vmatpush.msra.mxu0 0.0
  %636 = vmatpush.msra.mxu0 0.0
  %637 = vmatpush.msra.mxu0 0.0
  %638 = vmatpush.msra.mxu0 %v609
  %639 = vmatpush.msra.mxu0 %v608
  %640 = vmatpush.msra.mxu0 %v607
  %641 = vmatpush.msra.mxu0 %v606
  %642 = vmatmul.f32.gmra.mxu0 %v624
  %v643 = vpop.f32.mrf.mxu0
  %v644 = vadd.f32 %v621, %v643
  %645 = vdwg.mxu0
  %v646 = vmax.f32 %v644, 0.0
  %v647 = vperm.slane %v619, 0
  %v649 = vsel %vm622, %v646, 0
  %651 = vmatpush.msra.mxu0 0.0
  %652 = vmatpush.msra.mxu0 0.0
  %653 = vmatpush.msra.mxu0 0.0
  %654 = vmatpush.msra.mxu0 0.0
  %655 = vmatpush.msra.mxu0 0.0
  %656 = vmatpush.msra.mxu0 0.0
  %657 = vmatpush.msra.mxu0 0.0
  %658 = vmatpush.msra.mxu0 0.0
  %659 = vmatpush.msra.mxu0 0.0
  %660 = vmatpush.msra.mxu0 0.0
  %661 = vmatpush.msra.mxu0 0.0
  %662 = vmatpush.msra.mxu0 0.0
  %663 = vmatpush.msra.mxu0 %v613
  %664 = vmatpush.msra.mxu0 %v612
  %665 = vmatpush.msra.mxu0 %v611
  %666 = vmatpush.msra.mxu0 %v610
  %667 = vmatmul.f32.gmra.mxu0 %v649
  %v668 = vpop.f32.mrf.mxu0
  %v669 = vadd.f32 %v647, %v668
  %670 = vdwg.mxu0
  %v671 = vmax.f32 %v669, 0.0
  %v672 = vperm.slane %v620, 0
  %v674 = vsel %vm622, %v671, 0
  %676 = vmatpush.msra.mxu0 0.0
  %677 = vmatpush.msra.mxu0 0.0
  %678 = vmatpush.msra.mxu0 0.0
  %679 = vmatpush.msra.mxu0 0.0
  %680 = vmatpush.msra.mxu0 0.0
  %681 = vmatpush.msra.mxu0 0.0
  %682 = vmatpush.msra.mxu0 0.0
  %683 = vmatpush.msra.mxu0 0.0
  %684 = vmatpush.msra.mxu0 0.0
  %685 = vmatpush.msra.mxu0 0.0
  %686 = vmatpush.msra.mxu0 0.0
  %687 = vmatpush.msra.mxu0 0.0
  %688 = vmatpush.msra.mxu0 %v617
  %689 = vmatpush.msra.mxu0 %v616
  %690 = vmatpush.msra.mxu0 %v615
  %691 = vmatpush.msra.mxu0 %v614
  %692 = vmatmul.f32.gmra.mxu0 %v674
  %v693 = vpop.f32.mrf.mxu0
  %v694 = vadd.f32 %v672, %v693
  %695 = vdwg.mxu0
  %696 = vst [vmem:[%s2] sm:$0xff] %v694
  // Predicated region
  $region10: #{metos_regressor_forward.1} parent=0 // pred_check
    _
  $region11: #{metos_regressor_forward.1} parent=0 // pred_check_branch
    %698 = sbr.rel (0) target = $region13
  $region12: #{metos_regressor_forward.1} parent=0 // pred_region
    _
  $region13: #{metos_regressor_forward.1} parent=0 // pred_fallthru
    _
  // Predicated region
  $region14: #{metos_regressor_forward.1} parent=0 // pred_check
    _
  $region15: #{metos_regressor_forward.1} parent=0 // pred_check_branch
    %700 = sbr.rel (0) target = $region17
  $region16: #{metos_regressor_forward.1} parent=0 // pred_region
    _
  $region17: #{metos_regressor_forward.1} parent=0 // pred_fallthru
    _

</llo_original>
